<compile_context>
chip_gen: v6e
topology: v6e:2x2x1
jax: 0.10.0
libtpu: 0.0.40
codegen_flags: <defaults>
</compile_context>

<pallas_src>
import functools
import numpy as np
import jax
import jax.numpy as jnp
from jax.experimental import pallas as pl
from jax.experimental.pallas import tpu as pltpu


# ---------------------------------------------------------------------------
# Kernel
# ---------------------------------------------------------------------------
def _ls_loss_kernel(pred_ref, tgt_ref, sum_ref, *,
                    smoothing, confidence, classes, ignore_index):
    # Per-core running-sum init on the first step of the reduction axis.
    @pl.when(pl.program_id(1) == 0)
    def _():
        sum_ref[...] = jnp.zeros_like(sum_ref)

    # NOTE: f32 internal math.  A bf16 max-subtract / exp path on v6e/v7x
    # would halve EUP work, but is only worth it if profiling shows the EUP
    # slot saturated; the more accurate f32 path is kept here.
    x = pred_ref[...].astype(jnp.float32)          # (TR, C) logits
    t = tgt_ref[...]                               # (TR, 1) int32 labels

    # Stable log-softmax pieces; logp is never materialized.
    m = jnp.max(x, axis=-1, keepdims=True)
    z = x - m
    lse = jnp.log(jnp.sum(jnp.exp(z), axis=-1, keepdims=True))      # (TR, 1)

    # Fused weighted reduction (one cross-lane reduce instead of two):
    #   true_dist_j = smooth_val everywhere, `confidence` at the target, and
    #   loss_i = -sum_j true_dist_j * logp_ij = lse_i - sum_j w_j * z_ij
    # because sum_j true_dist_j == 1 exactly.
    smooth_val = smoothing / (classes - 1)
    cls_ids = jax.lax.broadcasted_iota(jnp.int32, z.shape, 1)
    w = jnp.where(cls_ids == t, confidence, smooth_val)
    wz = jnp.sum(w * z, axis=-1, keepdims=True)                      # (TR, 1)
    loss = lse - wz

    # Rows whose label is ignore_index (true ignore labels, out-of-pack rows,
    # wrapper-padded rows, and any garbage rows of a trailing partial logits
    # block) contribute nothing.  jnp.where squashes NaN/inf produced by
    # exp() of undefined partial-block data, so the sum stays finite.
    loss = jnp.where(t != ignore_index, loss, 0.0)

    # Broadcast-add the scalar partial into the whole (8,128) per-core block.
    sum_ref[...] += jnp.sum(loss)


# ---------------------------------------------------------------------------
# Chip / tiling parameters
# ---------------------------------------------------------------------------
def _chip_params():
    """Return (num_grid_cores, vmem_capacity_bytes) with safe fallbacks."""
    kind = ""
    try:
        kind = jax.devices()[0].device_kind.lower()
    except Exception:
        pass

    vmem_cap = None
    try:
        vmem_cap = int(pltpu.get_tpu_info().vmem_capacity_bytes)
    except Exception:
        vmem_cap = None
    if not vmem_cap:
        # v7x has 64 MiB VMEM per TensorCore; v5e / v6e have 128 MiB.
        vmem_cap = (64 << 20) if ("v7" in kind or "7x" in kind) else (128 << 20)

    # A leading "parallel" grid axis only pays off on chips with 2
    # TensorCores per device (v7x / v4 / v5p); on single-TC v5e / v6e it is
    # just a sequential outer loop, so keep it at 1 there.
    megacore = any(s in kind for s in ("v4", "v5p", "v7", "7x"))
    num_cores = 2 if megacore else 1
    return num_cores, vmem_cap


def _choose_tr(n_rows, classes, itemsize, vmem_cap):
    """Row tile (multiple of the packed-sublane size), chosen by BYTES."""
    sublane = max(8, 32 // itemsize)        # 8 f32, 16 bf16, 32 int8/fp8

    # Leave headroom below physical VMEM: request at most ~75% of capacity as
    # the scoped limit and budget the working set to ~60% of that.
    vmem_limit_cap = int(vmem_cap) * 3 // 4
    budget = int(vmem_limit_cap * 0.6)

    # Per row: double-buffered DMA block (2 * C * itemsize) plus roughly four
    # (TR, C) f32 temporaries (upcast x, z, exp(z), weights) from the body.
    per_row = 2 * classes * itemsize + 16 * classes

    # TODO(synk): class-tiled online-logsumexp (flash-style running max /
    # sum-exp over C chunks) for very large vocabularies; currently a single
    # (TR, C) block must fit the VMEM budget.
    if sublane * per_row > budget:
        raise NotImplementedError(
            f"classes={classes} too large for a single-block log-softmax "
            f"within the {vmem_cap >> 20} MiB VMEM of this chip")

    # Target streaming logits block: ~2 MiB on v7x (64 MiB VMEM), ~4 MiB on
    # v5e/v6e (128 MiB).  Mem-bound kernels reach ~85%+ of the HBM roofline
    # at >=1-2 MiB tiles, with small further gains up to ~4 MiB.
    target_block_bytes = (2 << 20) if vmem_cap <= (64 << 20) else (4 << 20)

    tr = min(budget // per_row, target_block_bytes // (classes * itemsize))
    tr = max(sublane, (tr // sublane) * sublane)
    # Never use a tile larger than the (sublane-rounded-up) row count.
    tr = min(tr, max(sublane, pl.cdiv(n_rows, sublane) * sublane))
    return tr, vmem_limit_cap


# ---------------------------------------------------------------------------
# Wrapper
# ---------------------------------------------------------------------------
def label_smoothing_loss(pred, target, length, *, classes, smoothing=0.0,
                         ignore_index=0):
    """Pallas port of LabelSmoothingLoss.forward(pred, target, length).

    pred:   (B, T, C) batch-first logits (class axis last).
    target: (B, T) integer labels.
    length: static Python list of ints (pack_padded_sequence semantics);
            dynamic lengths would retrace — deployment hazard, not a bug.
    """
    B, T, C = pred.shape
    assert C == classes
    assert classes >= 2, "smoothing/(classes-1) requires at least 2 classes"
    confidence = 1.0 - smoothing

    # TODO(synk): the PyTorch reference crashes if ignore_index < 0
    # (masked_indices stays None yet is dereferenced); require >= 0 here.
    assert ignore_index >= 0

    L = [int(l) - 1 for l in length]
    assert all(0 <= l <= T - 1 for l in L)
    # pack_padded_sequence(enforce_sorted=True) fidelity check; the loss
    # itself is order-independent.
    assert all(L[i] >= L[i + 1] for i in range(len(L) - 1)), \
        "lengths must be sorted descending (enforce_sorted=True)"

    # --- tiny per-row label / validity array; the logits are NOT copied ---
    # Flat row r corresponds to (b, t) = (r // T, r % T); its label is
    # target[b, t+1] when t < L[b], else ignore_index (masked out).
    target_i32 = target.astype(jnp.int32)
    shifted = jnp.concatenate(
        [target_i32[:, 1:], jnp.full((B, 1), ignore_index, jnp.int32)], axis=1)
    t_iota = jnp.arange(T, dtype=jnp.int32)[None, :]
    L_arr = jnp.asarray(L, jnp.int32)[:, None]
    labels = jnp.where(t_iota < L_arr, shifted, ignore_index)        # (B, T)

    # Valid-row count (the denominator) computed here on the tiny label
    # array instead of inside the kernel.
    total_cnt = jnp.sum((labels != ignore_index).astype(jnp.float32))

    labels = labels.reshape(B * T, 1)
    pred_rows = pred.reshape(B * T, C)          # free reshape, no HBM copy
    n_rows = B * T

    num_cores, vmem_cap = _chip_params()
    itemsize = int(jnp.dtype(pred.dtype).itemsize)
    TR, vmem_limit_cap = _choose_tr(n_rows, C, itemsize, vmem_cap)

    n_blocks = pl.cdiv(n_rows, TR)
    num_cores = min(num_cores, n_blocks)        # no empty cores on tiny inputs
    bpc = pl.cdiv(n_blocks, num_cores)          # blocks per core
    total_blocks = num_cores * bpc
    max_blk = (n_rows - 1) // TR                # last in-bounds logits block

    # Pad only the tiny label array; padded rows carry ignore_index so any
    # clamped / trailing-partial logits blocks they pair with are masked.
    labels = jnp.pad(labels, ((0, total_blocks * TR - n_rows), (0, 0)),
                     constant_values=ignore_index)

    kernel = functools.partial(
        _ls_loss_kernel,
        smoothing=float(smoothing),
        confidence=float(confidence),
        classes=int(classes),
        ignore_index=int(ignore_index))

    # Scoped-VMEM request: what the kernel actually needs (double-buffered
    # logits block + f32 temporaries) with slack, capped well below the
    # physical capacity (≈48 MiB on v7x, ≈96 MiB on v5e/v6e).
    needed = TR * C * (2 * itemsize + 16) + (1 << 20)
    vmem_limit = int(min(vmem_limit_cap, max(16 << 20, 2 * needed)))

    sum_out = pl.pallas_call(
        kernel,
        out_shape=jax.ShapeDtypeStruct((num_cores * 8, 128), jnp.float32),
        grid_spec=pltpu.PrefetchScalarGridSpec(
            num_scalar_prefetch=0,
            grid=(num_cores, bpc),
            in_specs=[
                # Logits: clamp the block index so every DMA starts in
                # bounds; overlapped / trailing-partial rows are masked via
                # ignore labels (jnp.where squashes any NaN they produce).
                pl.BlockSpec((TR, C),
                             lambda c, i: (jnp.minimum(c * bpc + i, max_blk), 0)),
                pl.BlockSpec((TR, 1), lambda c, i: (c * bpc + i, 0)),
            ],
            out_specs=pl.BlockSpec((8, 128), lambda c, i: (c, 0)),
        ),
        compiler_params=pltpu.CompilerParams(
            dimension_semantics=("parallel", "arbitrary"),
            vmem_limit_bytes=vmem_limit),
    )(pred_rows, labels)

    # Per-core partials are replicated across their (8,128) block; pick one
    # element per core and reduce.
    total_sum = jnp.sum(sum_out[::8, 0])
    # TODO(synk): if every packed row has label == ignore_index the
    # denominator is 0 and this returns inf/NaN, exactly like the reference.
    return (total_sum / total_cnt).astype(jnp.float32)


# ---------------------------------------------------------------------------
# Pure-JAX reference (replicates the PyTorch forward) + self-test
# ---------------------------------------------------------------------------
def _reference(pred, target, length, *, classes, smoothing, ignore_index):
    target = target[:, 1:]
    L = [int(l) - 1 for l in length]
    rows_p, rows_t = [], []
    for step in range(max(L)):
        for b in range(pred.shape[0]):
            if L[b] > step:
                rows_p.append(pred[b, step])
                rows_t.append(target[b, step])
    p = jnp.stack(rows_p)
    t = jnp.stack(rows_t)
    logp = jax.nn.log_softmax(p, axis=-1)
    conf = 1.0 - smoothing
    true_dist = jnp.full_like(logp, smoothing / (classes - 1))
    true_dist = true_dist.at[jnp.arange(t.shape[0]), t].set(conf)
    loss = jnp.sum(-true_dist * logp, axis=-1)
    masked = t == ignore_index
    loss = jnp.where(masked, 0.0, loss)
    return loss.sum() / (loss.shape[0] - masked.sum())


if __name__ == "__main__":
    key = jax.random.PRNGKey(0)
    B, T, C = 2, 9, 32
    smoothing = 0.1
    ignore_index = 0          # labels equal to 0 are ignored (pad token)
    length = [9, 7]           # sorted descending, as pack_padded_sequence requires

    k1, k2 = jax.random.split(key)
    pred = jax.random.normal(k1, (B, T, C), dtype=jnp.float32)
    target = jax.random.randint(k2, (B, T), 0, C, dtype=jnp.int32)

    out = label_smoothing_loss(pred, target, length, classes=C,
                               smoothing=smoothing, ignore_index=ignore_index)
    out = jax.block_until_ready(out)

    ref = _reference(pred, target, length, classes=C, smoothing=smoothing,
                     ignore_index=ignore_index)
    assert np.allclose(np.asarray(out), np.asarray(ref), rtol=1e-5, atol=1e-5), (out, ref)
    print("KERNEL_OK")
</pallas_src>

<mosaic_0001>
module attributes {stable_mosaic.version = 11 : i64} {
  func.func @_ls_loss_kernel(%arg0: i32, %arg1: i32, %arg2: memref<24x32xf32, #tpu.memory_space<vmem>>, %arg3: memref<24x1xi32, #tpu.memory_space<vmem>>, %arg4: memref<8x128xf32, #tpu.memory_space<vmem>>) attributes {dimension_semantics = [#tpu.dimension_semantics<parallel>, #tpu.dimension_semantics<arbitrary>], iteration_bounds = array<i64: 1, 1>, scalar_prefetch = 0 : i64, scratch_operands = 0 : i64, tpu.core_type = #tpu.core_type<tc>, window_params = [{transform_indices = @transform_0, window_bounds = array<i64: 24, 32>}, {transform_indices = @transform_1, window_bounds = array<i64: 24, 1>}, {transform_indices = @transform_2, window_bounds = array<i64: 8, 128>}]} {
    %c0_i32 = arith.constant 0 : i32
    %0 = arith.cmpi eq, %arg1, %c0_i32 : i32
    %1 = arith.extui %0 : i1 to i32
    %c0_i32_0 = arith.constant 0 : i32
    %2 = arith.cmpi ne, %1, %c0_i32_0 : i32
    scf.if %2 {
      %cst_15 = arith.constant 0.000000e+00 : f32
      %35 = vector.broadcast %cst_15 : f32 to vector<8x128xf32>
      %c0_16 = arith.constant 0 : index
      %c0_17 = arith.constant 0 : index
      %36 = vector.load %arg4[%c0_16, %c0_17] : memref<8x128xf32, #tpu.memory_space<vmem>>, vector<8x128xf32>
      tpu.vector_store %arg4[%c0_16, %c0_17], %35 {strides = array<i32>} : memref<8x128xf32, #tpu.memory_space<vmem>>, vector<8x128xf32>,
    } else {
    }
    %c0 = arith.constant 0 : index
    %c0_1 = arith.constant 0 : index
    %3 = vector.load %arg2[%c0, %c0_1] : memref<24x32xf32, #tpu.memory_space<vmem>>, vector<24x32xf32>
    %c0_2 = arith.constant 0 : index
    %c0_3 = arith.constant 0 : index
    %4 = vector.load %arg3[%c0_2, %c0_3] : memref<24x1xi32, #tpu.memory_space<vmem>>, vector<24x1xi32>
    %cst = arith.constant dense<0xFF800000> : vector<24xf32>
    %5 = vector.multi_reduction <maximumf>, %3, %cst [1] : vector<24x32xf32> to vector<24xf32>
    %6 = vector.shape_cast %5 : vector<24xf32> to vector<24x1xf32>
    %7 = vector.broadcast %6 : vector<24x1xf32> to vector<24x32xf32>
    %8 = arith.subf %3, %7 : vector<24x32xf32>
    %9 = math.exp %8 : vector<24x32xf32>
    %cst_4 = arith.constant dense<0.000000e+00> : vector<24xf32>
    %10 = vector.multi_reduction <add>, %9, %cst_4 [1] : vector<24x32xf32> to vector<24xf32>
    %11 = vector.shape_cast %10 : vector<24xf32> to vector<24x1xf32>
    %12 = math.log %11 : vector<24x1xf32>
    %13 = tpu.iota {dimensions = array<i32: 1>} : vector<24x32xi32>
    %14 = vector.broadcast %4 : vector<24x1xi32> to vector<24x32xi32>
    %15 = arith.cmpi eq, %13, %14 : vector<24x32xi32>
    %cst_5 = arith.constant 0.899999976 : f32
    %cst_6 = arith.constant 0.0032258064 : f32
    %16 = vector.broadcast %cst_5 : f32 to vector<24x32xf32>
    %17 = vector.broadcast %cst_6 : f32 to vector<24x32xf32>
    %18 = arith.select %15, %16, %17 : vector<24x32xi1>, vector<24x32xf32>
    %19 = arith.mulf %18, %8 : vector<24x32xf32>
    %cst_7 = arith.constant dense<0.000000e+00> : vector<24xf32>
    %20 = vector.multi_reduction <add>, %19, %cst_7 [1] : vector<24x32xf32> to vector<24xf32>
    %21 = vector.shape_cast %20 : vector<24xf32> to vector<24x1xf32>
    %22 = arith.subf %12, %21 : vector<24x1xf32>
    %c0_i32_8 = arith.constant 0 : i32
    %23 = vector.broadcast %c0_i32_8 : i32 to vector<24x1xi32>
    %24 = arith.cmpi ne, %4, %23 : vector<24x1xi32>
    %cst_9 = arith.constant 0.000000e+00 : f32
    %25 = vector.broadcast %cst_9 : f32 to vector<24x1xf32>
    %26 = arith.select %24, %22, %25 : vector<24x1xi1>, vector<24x1xf32>
    %c0_10 = arith.constant 0 : index
    %c0_11 = arith.constant 0 : index
    %27 = vector.load %arg4[%c0_10, %c0_11] : memref<8x128xf32, #tpu.memory_space<vmem>>, vector<8x128xf32>
    %28 = vector.shape_cast %26 : vector<24x1xf32> to vector<1x24x1xf32>
    %cst_12 = arith.constant dense<0.000000e+00> : vector<1xf32>
    %29 = vector.multi_reduction <add>, %28, %cst_12 [1, 2] : vector<1x24x1xf32> to vector<1xf32>
    %30 = vector.shape_cast %29 : vector<1xf32> to vector<1x1x1xf32>
    %31 = vector.extract %30[0, 0, 0] : f32 from vector<1x1x1xf32>
    %32 = vector.broadcast %31 : f32 to vector<8x128xf32>
    %33 = arith.addf %27, %32 : vector<8x128xf32>
    %c0_13 = arith.constant 0 : index
    %c0_14 = arith.constant 0 : index
    %34 = vector.load %arg4[%c0_13, %c0_14] : memref<8x128xf32, #tpu.memory_space<vmem>>, vector<8x128xf32>
    tpu.vector_store %arg4[%c0_13, %c0_14], %33 {strides = array<i32>} : memref<8x128xf32, #tpu.memory_space<vmem>>, vector<8x128xf32>,
    return
  }
  func.func @transform_0(%arg0: i32, %arg1: i32) -> (i32, i32) {
    %c1_i32 = arith.constant 1 : i32
    %0 = arith.muli %arg0, %c1_i32 : i32
    %1 = arith.addi %0, %arg1 : i32
    %c0_i32 = arith.constant 0 : i32
    %2 = arith.minsi %1, %c0_i32 : i32
    %c0_i32_0 = arith.constant 0 : i32
    %c0_i32_1 = arith.constant 0 : i32
    return %2, %c0_i32_0 : i32, i32
  }
  func.func @transform_1(%arg0: i32, %arg1: i32) -> (i32, i32) {
    %c1_i32 = arith.constant 1 : i32
    %0 = arith.muli %arg0, %c1_i32 : i32
    %1 = arith.addi %0, %arg1 : i32
    %c0_i32 = arith.constant 0 : i32
    %c0_i32_0 = arith.constant 0 : i32
    return %1, %c0_i32 : i32, i32
  }
  func.func @transform_2(%arg0: i32, %arg1: i32) -> (i32, i32) {
    %c0_i32 = arith.constant 0 : i32
    %c0_i32_0 = arith.constant 0 : i32
    return %arg0, %c0_i32 : i32, i32
  }
}

</mosaic_0001>

<llo_original>
// kernel: tpu_custom_call.1
$region0: #{tpu_custom_call.1}
  #allocation0 [shape = 'u32[]', space=smem, size = 0x4, offset = 0x4, fixed_abs, tag = 'smem constant byte address 0x4 - core index']
  #allocation1 [shape = 'u32[144,128]{1,0:T(1,128)}', space=vmem, size = 0x12000, scoped, tag = 'internal scratch']
  %s0 = inlined_call_operand.vmem [shape: f32[18,32], index: 0, kind: input, shape index: {}]
  %s1 = inlined_call_operand.vmem [shape: s32[24,1], index: 1, kind: input, shape index: {}]
  %s2 = inlined_call_operand.hbm [shape: f32[8,128], index: 2, kind: output, shape index: {}]
  %s3 = sld [smem:[#allocation0]]
  $region22: #{tpu_custom_call.1} parent=0
    _
  %s5 = ssub.s32 1, %s3
  %s6 = scalar_select 0, %s5, %s3
  $region1: #{tpu_custom_call.1} parent=0
    #allocation2 [shape = 'u8[4096]{0}', space=vmem, size = 0x1000, scoped, tag = 'output window, operand 0, single buffered']
    #allocation3 [shape = 's32[1]{0}', space=sflag, size = 0x4, scoped, tag = 'scoped memory for tpu_custom_call.1']
    %7 = vsyncpa [#allocation3], 0
    // Predicated region
    $region2: #{tpu_custom_call.1} parent=1 // pred_check
      _
    $region3: #{tpu_custom_call.1} parent=1 // pred_check_branch
      %9 = sbr.rel (0) target = $region5
    $region4: #{tpu_custom_call.1} parent=1 // pred_region
      %s10 = sadd.s32 0, 0
      %p11 = scmp.lt.s32.totalorder %s10, 0
      %s12 = scalar_select %p11, %s10, 0
      %s13 = smul.u32 3, %s12
      %p14 = scmp.lt.s32.totalorder %s13, 2
      %s15 = scalar_select %p14, %s13, 2
      %s16 = smul.addr %s15, 8
      %s17 = scalar_lea.vmem %s0, %s16
      %s18 = sadd.s32 0, 0
      %p19 = scmp.lt.s32.totalorder %s18, 0
      %s20 = scalar_select %p19, %s18, 0
      %s21 = smul.u32 3, %s20
    $region5: #{tpu_custom_call.1} parent=1 // pred_fallthru
      _
    // Predicated region
    $region6: #{tpu_custom_call.1} parent=1 // pred_check
      _
    $region7: #{tpu_custom_call.1} parent=1 // pred_check_branch
      %23 = sbr.rel (0) target = $region9
    $region8: #{tpu_custom_call.1} parent=1 // pred_region
      %s24 = sadd.s32 0, 0
      %s25 = smul.u32 3, %s24
      %p26 = scmp.lt.s32.totalorder %s25, 2
      %s27 = scalar_select %p26, %s25, 2
      %s28 = smul.addr %s27, 8
      %s29 = scalar_lea.vmem %s1, %s28
      %s30 = sadd.s32 0, 0
      %s31 = smul.u32 3, %s30
    $region9: #{tpu_custom_call.1} parent=1 // pred_fallthru
      _
    %s32 = sadd.s32 0, 0
    %p33 = scmp.lt.s32.totalorder %s32, 0
    %s34 = scalar_select %p33, %s32, 0
    %s35 = smul.u32 3, %s34
    %p36 = scmp.lt.s32.totalorder %s35, 2
    %s37 = scalar_select %p36, %s35, 2
    %s38 = smul.addr %s37, 8
    %s39 = scalar_lea.vmem %s0, %s38
    %s40 = sadd.s32 0, 0
    %s41 = smul.u32 3, %s40
    %p42 = scmp.lt.s32.totalorder %s41, 2
    %s43 = scalar_select %p42, %s41, 2
    %s44 = smul.addr %s43, 8
    %s45 = scalar_lea.vmem %s1, %s44
    %s46 = sadd.s32 0, 0
    %p47 = scmp.lt.s32.totalorder %s46, 0
    %s48 = scalar_select %p47, %s46, 0
    %s49 = smul.u32 3, %s48
    %p50 = scmp.lt.s32.totalorder %s49, 2
    %s51 = scalar_select %p50, %s49, 2
    %s52 = smul.addr %s51, 8
    %s53 = scalar_lea.vmem %s0, %s52
    %s54 = sadd.s32 0, 0
    %p55 = scmp.lt.s32.totalorder %s54, 0
    %s56 = scalar_select %p55, %s54, 0
    %s57 = smul.u32 3, %s56
    %s58 = sadd.s32 0, 0
    %s59 = smul.u32 3, %s58
    %p60 = scmp.lt.s32.totalorder %s59, 2
    %s61 = scalar_select %p60, %s59, 2
    %s62 = smul.addr %s61, 8
    %s63 = scalar_lea.vmem %s1, %s62
    %s64 = sadd.s32 0, 0
    %s65 = smul.u32 3, %s64
    %p66 = scmp.eq.s32.totalorder 0, 0
    // Predicated region
    $region10: #{tpu_custom_call.1} parent=1 // pred_check
      %p67 = pneg %p66
    $region11: #{tpu_custom_call.1} parent=1 // pred_check_branch
      %69 = sbr.rel (%p67) target = $region13
    $region12: #{tpu_custom_call.1} parent=1 // pred_region
      %70 = vst [vmem:[#allocation2] sm:$0xff] 0.0
    $region13: #{tpu_custom_call.1} parent=1 // pred_fallthru
      _
    %v71 = vld [vmem:[%s53] sm:$0xff]
    %v72 = vld [vmem:[%s53 + $0x8] sm:$0xff]
    %v73 = vld [vmem:[%s53 + $0x10] sm:$0xff]
    %v74 = vld [vmem:[%s63] sm:$0xff]
    %v75 = vld [vmem:[%s63 + $0x8] sm:$0xff]
    %v76 = vld [vmem:[%s63 + $0x10] sm:$0xff]
    %vm77 = vcmask 261120
    %v78 = vsel %vm77, %v71, -inf
    %79 = vmax.xlane.f32.xlu0 %v78
    %v80 = vpop.xlane.xlu0 %79
    %v81 = vsel %vm77, %v72, -inf
    %82 = vmax.xlane.f32.xlu0 %v81
    %v83 = vpop.xlane.xlu0 %82
    %v84 = vsel %vm77, %v73, -inf
    %85 = vmax.xlane.f32.xlu0 %v84
    %v86 = vpop.xlane.xlu0 %85
    %v87 = vsub.f32 %v71, %v80
    %v88 = vsub.f32 %v72, %v83
    %v89 = vsub.f32 %v73, %v86
    %v90 = vmul.f32 %v87, 1.442695
    %v91 = vpow.pop %v90
    %v92 = vmul.f32 %v88, 1.442695
    %v93 = vpow.pop %v92
    %v94 = vmul.f32 %v89, 1.442695
    %v95 = vpow.pop %v94
    %v96 = vsel %vm77, %v91, 0.0
    %97 = vadd.xlane.f32.xlu0 %v96
    %v98 = vpop.xlane.xlu0 %97
    %v99 = vsel %vm77, %v93, 0.0
    %100 = vadd.xlane.f32.xlu0 %v99
    %v101 = vpop.xlane.xlu0 %100
    %v102 = vsel %vm77, %v95, 0.0
    %103 = vadd.xlane.f32.xlu0 %v102
    %v104 = vpop.xlane.xlu0 %103
    %v105 = vlog2.pop %v98
    %v106 = vmul.f32 %v105, 0.6931472
    %v107 = vlog2.pop %v101
    %v108 = vmul.f32 %v107, 0.6931472
    %v109 = vlog2.pop %v104
    %v110 = vmul.f32 %v109, 0.6931472
    %v111 = vlaneseq
    %v112 = vand.u32 %v111, 127
    %113 = vset.pattern.permute.xlu0 0
    %114 = vperm.xlu0 %113, %v74
    %v115 = vpop.permute.xlu0 %114
    %116 = vset.pattern.permute.xlu0 0
    %117 = vperm.xlu0 %116, %v75
    %v118 = vpop.permute.xlu0 %117
    %119 = vset.pattern.permute.xlu0 0
    %120 = vperm.xlu0 %119, %v76
    %v121 = vpop.permute.xlu0 %120
    %vm122 = vcmp.eq.s32.totalorder %v112, %v115
    %vm123 = vcmp.eq.s32.totalorder %v112, %v118
    %vm124 = vcmp.eq.s32.totalorder %v112, %v121
    %v125 = vsel %vm122, 0.9, 0.0032258064
    %v126 = vsel %vm123, 0.9, 0.0032258064
    %v127 = vsel %vm124, 0.9, 0.0032258064
    %v128 = vmul.f32 %v125, %v87
    %v129 = vmul.f32 %v126, %v88
    %v130 = vmul.f32 %v127, %v89
    %v131 = vsel %vm77, %v128, 0.0
    %132 = vadd.xlane.f32.xlu0 %v131
    %v133 = vpop.xlane.xlu0 %132
    %v134 = vsel %vm77, %v129, 0.0
    %135 = vadd.xlane.f32.xlu0 %v134
    %v136 = vpop.xlane.xlu0 %135
    %v137 = vsel %vm77, %v130, 0.0
    %138 = vadd.xlane.f32.xlu0 %v137
    %v139 = vpop.xlane.xlu0 %138
    %v140 = vsub.f32 %v106, %v133
    %v141 = vsub.f32 %v108, %v136
    %v142 = vsub.f32 %v110, %v139
    %vm143 = vcmp.ne.s32.totalorder %v74, 0
    %vm144 = vcmp.ne.s32.totalorder %v75, 0
    %vm145 = vcmp.ne.s32.totalorder %v76, 0
    %v146 = vsel %vm143, %v140, 0.0
    %v147 = vsel %vm144, %v141, 0.0
    %v148 = vsel %vm145, %v142, 0.0
    %v149 = vld [vmem:[#allocation2] sm:$0xff]
    %vm150 = vcmask 7168
    %v151 = vsel %vm150, %v146, 0.0
    %v152 = vsel %vm150, %v147, 0.0
    %v153 = vadd.f32 %v151, %v152
    %v154 = vsel %vm150, %v148, 0.0
    %v155 = vadd.f32 %v153, %v154
    %156 = vadd.xlane.f32.xlu0 %v155
    %v157 = vpop.xlane.xlu0 %156
    %v158 = vrot.slane %v157, 4
    %v159 = vadd.f32 %v157, %v158
    %v160 = vrot.slane %v159, 2
    %v161 = vadd.f32 %v159, %v160
    %v162 = vrot.slane %v161, 1
    %v163 = vadd.f32 %v161, %v162
    %s164 = vtos %v163
    %v165 = vstv %s164
    %v166 = vadd.f32 %v149, %v165
    %167 = vst [vmem:[#allocation2] sm:$0xff] %v166
    // Predicated region
    $region14: #{tpu_custom_call.1} parent=1 // pred_check
      _
    $region15: #{tpu_custom_call.1} parent=1 // pred_check_branch
      %169 = sbr.rel (0) target = $region17
    $region16: #{tpu_custom_call.1} parent=1 // pred_region
      %s171 = ssub.s32 128, 128
      %172 = vsyncadd [#allocation3], %s171
      %s174 = sshll.u32 [#allocation2], 4
      %s175 = int_to_ptr.vmem [resolvable:$true] %s174
      %177 = dma.vmem_to_hbm [thread:$0]  %s175, 128, %s2, [#allocation3]
    $region17: #{tpu_custom_call.1} parent=1 // pred_fallthru
      _
    // Predicated region
    $region18: #{tpu_custom_call.1} parent=1 // pred_check
      _
    $region19: #{tpu_custom_call.1} parent=1 // pred_check_branch
      %179 = sbr.rel (0) target = $region21
    $region20: #{tpu_custom_call.1} parent=1 // pred_region
      %180 = dma.done [#allocation3], 128
    $region21: #{tpu_custom_call.1} parent=1 // pred_fallthru
      _
    %181 = vsyncpa [#allocation3], 1

</llo_original>
